<compile_context>
chip_gen: v6e
topology: v6e:2x2x1
jax: 0.10.0
libtpu: 0.0.40
codegen_flags: <defaults>
</compile_context>

<pallas_src>
import jax
import jax.numpy as jnp
from jax.experimental import pallas as pl
from jax.experimental.pallas import tpu as pltpu

# ---------------- model hyper-parameters (match the PyTorch module) ------------
NUM_TEAMS = 8
EMBED_DIM = 10
EMBED_PAD = 16                      # embed dim zero-padded so fused K = 3*16 = 48
N_CONV = 3
CONV_DIMS = (32, 32, 32)            # conv_dims[:n_conv]
N_DENSE = 5
DENSE_DIMS = (8, 8, 8, 8, 8)
N_RELATION = 2
TARGET_DIM = 3
TARGET_PAD = 8                      # logits padded to 8 lanes (pads get -1e30 bias)
NEG_SLOPE = 0.01                    # nn.LeakyReLU default negative_slope
NEG_BIG = -1e30

# ---------------- static slab layouts ------------------------------------------
CONV_IN_DIMS = (EMBED_PAD,) + tuple(CONV_DIMS[: N_CONV - 1])   # (16, 32, 32)
CONV_WIDTH = CONV_DIMS[0]                                      # 32

_r = 0
_cw = []
for _d in CONV_IN_DIMS:
    _cw.append(_r)
    _r += 3 * _d
_cb = []
for _ in range(N_CONV):
    _cb.append(_r)
    _r += NUM_TEAMS
CONV_W_OFFS = tuple(_cw)            # (0, 48, 144)
CONV_B_OFFS = tuple(_cb)            # (240, 248, 256)
CONV_SLAB_ROWS = _r                 # 264

DENSE_WIDTH = 8                     # = max(dense_dims + (TARGET_PAD,))
D0_HALF = CONV_DIMS[N_CONV - 1]     # 32  (first dense weight split top/bottom)
DENSE_W_ROWS = (D0_HALF, D0_HALF) + (DENSE_WIDTH,) * (N_DENSE - 1)  # (32,32,8,8,8,8)
BIAS_ROWS = 8

_r = 0
_dw = []
for _d in DENSE_W_ROWS:
    _dw.append(_r)
    _r += _d
_db = []
for _ in range(N_DENSE):
    _db.append(_r)
    _r += BIAS_ROWS
DENSE_W_OFFS = tuple(_dw)           # (0, 32, 64, 72, 80, 88)
DENSE_B_OFFS = tuple(_db)           # (96, 104, 112, 120, 128)
DENSE_SLAB_ROWS = _r                # 136


# ---------------------------------- kernel -------------------------------------
def gnn_kernel(graph_ref, emb_ref, conv_ref, dense_ref, out_ref):
    B = out_ref.shape[0]

    def leaky(v):
        return jnp.where(v > 0, v, NEG_SLOPE * v)

    A = graph_ref[0:N_RELATION * NUM_TEAMS, :]                                   # (16, 8)
    S = graph_ref[N_RELATION * NUM_TEAMS:N_RELATION * NUM_TEAMS + 2 * B, :]      # (2B, 8)

    # x = embedding(arange(num_teams))  -> the (zero-col-padded) embedding table
    x = emb_ref[...]                                                             # (8, 16)

    # ----- 3 RGCN layers:  out = [x | A0x | A1x] @ [Wroot; Wr0; Wr1] + b -------
    for i in range(N_CONV):
        din = CONV_IN_DIMS[i]
        ax = jnp.dot(A, x, preferred_element_type=jnp.float32)                  # (16, din)
        xcat = jnp.concatenate(
            [x, ax[0:NUM_TEAMS, :], ax[NUM_TEAMS:2 * NUM_TEAMS, :]], axis=1)     # (8, 3*din)
        wcat = conv_ref[CONV_W_OFFS[i]:CONV_W_OFFS[i] + 3 * din, :]              # (3*din, 32)
        bias = conv_ref[CONV_B_OFFS[i]:CONV_B_OFFS[i] + NUM_TEAMS, :]            # (8, 32)
        x = leaky(jnp.dot(xcat, wcat, preferred_element_type=jnp.float32) + bias)
        # TODO(synk): Dropout(p=0.1) treated as identity (inference/eval mode).

    # ----- fused home/away gather + first dense layer --------------------------
    sx = jnp.dot(S, x, preferred_element_type=jnp.float32)                       # (2B, 32)
    hx = sx[0:B, :]
    aw = sx[B:2 * B, :]
    w0t = dense_ref[DENSE_W_OFFS[0]:DENSE_W_OFFS[0] + D0_HALF, :]                # (32, 8)
    w0b = dense_ref[DENSE_W_OFFS[1]:DENSE_W_OFFS[1] + D0_HALF, :]                # (32, 8)
    b0 = dense_ref[DENSE_B_OFFS[0]:DENSE_B_OFFS[0] + 1, :]                       # (1, 8)
    h = leaky(jnp.dot(hx, w0t, preferred_element_type=jnp.float32)
              + jnp.dot(aw, w0b, preferred_element_type=jnp.float32) + b0)

    # ----- remaining 4 dense layers (last one col-padded 3 -> 8) ---------------
    for i in range(1, N_DENSE):
        off = DENSE_W_OFFS[i + 1]
        w = dense_ref[off:off + DENSE_W_ROWS[i + 1], :]                          # (8, 8)
        b = dense_ref[DENSE_B_OFFS[i]:DENSE_B_OFFS[i] + 1, :]                    # (1, 8)
        h = leaky(jnp.dot(h, w, preferred_element_type=jnp.float32) + b)

    # LogSoftmax over the 8 lanes: padded lanes carry ~-1e28 so exp underflows to
    # exactly 0 and the result equals log-softmax over the real 3 lanes.
    m = jnp.max(h, axis=1, keepdims=True)
    z = h - m
    lse = jnp.log(jnp.sum(jnp.exp(z), axis=1, keepdims=True))
    out_ref[...] = z - lse


# ----------------------------- host-side packing -------------------------------
def pack_conv_slab(conv_params):
    blocks = []
    for i, (wr, wroot, _) in enumerate(conv_params):
        din, dout = wroot.shape
        dpad = CONV_IN_DIMS[i]

        def pad_w(w):
            return jnp.pad(w, ((0, dpad - din), (0, CONV_WIDTH - dout)))

        wcat = jnp.concatenate(
            [pad_w(wroot)] + [pad_w(wr[r]) for r in range(N_RELATION)], axis=0)
        blocks.append(wcat)
    for (_, _, b) in conv_params:
        blocks.append(jnp.broadcast_to(b, (NUM_TEAMS, CONV_WIDTH)))
    slab = jnp.concatenate(blocks, axis=0)
    assert slab.shape == (CONV_SLAB_ROWS, CONV_WIDTH)
    return slab


def pack_dense_slab(lin_params):
    blocks = []
    w0, _ = lin_params[0]
    blocks.append(w0[:D0_HALF, :])                     # top half  (home features)
    blocks.append(w0[D0_HALF:, :])                     # bottom half (away features)
    for i in range(1, N_DENSE):
        w, _ = lin_params[i]
        blocks.append(jnp.pad(
            w, ((0, DENSE_WIDTH - w.shape[0]), (0, DENSE_WIDTH - w.shape[1]))))
    for i in range(N_DENSE):
        _, b = lin_params[i]
        dout = b.shape[1]
        if dout < DENSE_WIDTH:
            # padded logits get a huge negative bias -> exp() == 0 in log-softmax
            b = jnp.pad(b, ((0, 0), (0, DENSE_WIDTH - dout)), constant_values=NEG_BIG)
        blocks.append(jnp.broadcast_to(b, (BIAS_ROWS, DENSE_WIDTH)))
    slab = jnp.concatenate(blocks, axis=0)
    assert slab.shape == (DENSE_SLAB_ROWS, DENSE_WIDTH)
    return slab


def pack_graph_slab(A, s_home, s_away):
    a_stacked = A.reshape(N_RELATION * NUM_TEAMS, NUM_TEAMS)
    sel = jnp.concatenate([s_home, s_away], axis=0)
    return jnp.concatenate([a_stacked, sel], axis=0)


def gnn_forward(graph_slab, emb_padded, conv_slab, dense_slab, batch):
    vspec = pl.BlockSpec(memory_space=pltpu.MemorySpace.VMEM)
    out = pl.pallas_call(
        gnn_kernel,
        out_shape=jax.ShapeDtypeStruct((batch, TARGET_PAD), jnp.float32),
        in_specs=[vspec, vspec, vspec, vspec],
        out_specs=vspec,
        compiler_params=pltpu.CompilerParams(),
    )(graph_slab, emb_padded, conv_slab, dense_slab)
    return out[:, :TARGET_DIM]


# ----------------------------- pure-JAX reference ------------------------------
def reference_forward(A, s_home, s_away, emb, conv_params, lin_params):
    def leaky(v):
        return jnp.where(v > 0, v, NEG_SLOPE * v)

    x = emb
    for (wr, wroot, b) in conv_params:
        out = x @ wroot + b
        for r in range(N_RELATION):
            out = out + (A[r] @ x) @ wr[r]
        x = leaky(out)
    h = jnp.concatenate([s_home @ x, s_away @ x], axis=1)
    for (w, b) in lin_params:
        h = leaky(h @ w + b)
    return jax.nn.log_softmax(h, axis=1)


# ------------------------------------ main --------------------------------------
if __name__ == "__main__":
    key = jax.random.PRNGKey(0)
    keys = jax.random.split(key, 32)
    ki = iter(keys)

    # nn.Embedding(num_teams, embed_dim)
    emb = jax.random.normal(next(ki), (NUM_TEAMS, EMBED_DIM), jnp.float32)

    # RGCNConv params per layer: relation weights (R, in, out), root weight, bias
    conv_params = []
    dims = (EMBED_DIM,) + CONV_DIMS
    for i in range(N_CONV):
        din, dout = dims[i], dims[i + 1]
        wr = jax.random.normal(next(ki), (N_RELATION, din, dout), jnp.float32) * 0.1
        wroot = jax.random.normal(next(ki), (din, dout), jnp.float32) * 0.1
        b = jax.random.normal(next(ki), (1, dout), jnp.float32) * 0.1
        conv_params.append((wr, wroot, b))

    # Linear stack: 64 -> 8 -> 8 -> 8 -> 8 -> 3
    lin_dims = (CONV_DIMS[-1] * 2,) + DENSE_DIMS[: N_DENSE - 1] + (TARGET_DIM,)
    lin_params = []
    for i in range(N_DENSE):
        din, dout = lin_dims[i], lin_dims[i + 1]
        w = jax.random.normal(next(ki), (din, dout), jnp.float32) * 0.1
        b = jax.random.normal(next(ki), (1, dout), jnp.float32) * 0.1
        lin_params.append((w, b))

    # Deterministic synthetic graph: E directed typed edges over NUM_TEAMS nodes.
    E = 16
    src = jnp.arange(E) % NUM_TEAMS
    dst = (jnp.arange(E) * 3 + 1) % NUM_TEAMS
    etype = jnp.arange(E) % N_RELATION
    A = jnp.zeros((N_RELATION, NUM_TEAMS, NUM_TEAMS), jnp.float32)
    A = A.at[etype, dst, src].add(1.0)   # aggr='add': sum of messages src->dst

    # Batch of games: home/away team indices -> one-hot selectors
    B = 4
    home = jnp.array([0, 2, 4, 6], dtype=jnp.int32)
    away = jnp.array([1, 3, 5, 7], dtype=jnp.int32)
    s_home = jax.nn.one_hot(home, NUM_TEAMS, dtype=jnp.float32)
    s_away = jax.nn.one_hot(away, NUM_TEAMS, dtype=jnp.float32)

    # Host-side packing (params packed once at init in real use; graph per call).
    emb_padded = jnp.pad(emb, ((0, 0), (0, EMBED_PAD - EMBED_DIM)))
    conv_slab = pack_conv_slab(conv_params)
    dense_slab = pack_dense_slab(lin_params)
    graph_slab = pack_graph_slab(A, s_home, s_away)

    out = gnn_forward(graph_slab, emb_padded, conv_slab, dense_slab, B)
    out = jax.block_until_ready(out)

    ref = reference_forward(A, s_home, s_away, emb, conv_params, lin_params)
    assert out.shape == (B, TARGET_DIM)
    assert bool(jnp.all(jnp.isfinite(out)))
    assert bool(jnp.allclose(out, ref, atol=2e-4, rtol=2e-4))
    print("KERNEL_OK")
</pallas_src>

<mosaic_0001>
module attributes {stable_mosaic.version = 11 : i64} {
  func.func @gnn_kernel(%arg0: memref<24x8xf32, #tpu.memory_space<vmem>>, %arg1: memref<8x16xf32, #tpu.memory_space<vmem>>, %arg2: memref<264x32xf32, #tpu.memory_space<vmem>>, %arg3: memref<136x8xf32, #tpu.memory_space<vmem>>, %arg4: memref<4x8xf32, #tpu.memory_space<vmem>>) attributes {dimension_semantics = [], scalar_prefetch = 0 : i64, scratch_operands = 0 : i64, tpu.core_type = #tpu.core_type<tc>} {
    %c0 = arith.constant 0 : index
    %c0_0 = arith.constant 0 : index
    %0 = vector.load %arg0[%c0, %c0_0] : memref<24x8xf32, #tpu.memory_space<vmem>>, vector<16x8xf32>
    %c16 = arith.constant 16 : index
    %c0_1 = arith.constant 0 : index
    %1 = vector.load %arg0[%c16, %c0_1] : memref<24x8xf32, #tpu.memory_space<vmem>>, vector<8x8xf32>
    %c0_2 = arith.constant 0 : index
    %c0_3 = arith.constant 0 : index
    %2 = vector.load %arg1[%c0_2, %c0_3] : memref<8x16xf32, #tpu.memory_space<vmem>>, vector<8x16xf32>
    %cst = arith.constant dense<0.000000e+00> : vector<16x16xf32>
    %3 = tpu.matmul %0, %2, %cst {dimension_numbers = #tpu.dot_dimension_numbers<[1], [0], [0], [1], [0, 0, 1, 1], [], []>} : vector<16x8xf32>, vector<8x16xf32>, vector<16x16xf32> -> vector<16x16xf32>
    %4 = vector.extract_strided_slice %3 {offsets = [0, 0], sizes = [8, 16], strides = [1, 1]} : vector<16x16xf32> to vector<8x16xf32>
    %5 = vector.extract_strided_slice %3 {offsets = [8, 0], sizes = [8, 16], strides = [1, 1]} : vector<16x16xf32> to vector<8x16xf32>
    %6 = tpu.concatenate %2, %4, %5 in 1 : vector<8x16xf32>, vector<8x16xf32>, vector<8x16xf32> -> vector<8x48xf32>
    %c0_4 = arith.constant 0 : index
    %c0_5 = arith.constant 0 : index
    %7 = vector.load %arg2[%c0_4, %c0_5] : memref<264x32xf32, #tpu.memory_space<vmem>>, vector<48x32xf32>
    %c240 = arith.constant 240 : index
    %c0_6 = arith.constant 0 : index
    %8 = vector.load %arg2[%c240, %c0_6] : memref<264x32xf32, #tpu.memory_space<vmem>>, vector<8x32xf32>
    %cst_7 = arith.constant dense<0.000000e+00> : vector<8x32xf32>
    %9 = tpu.matmul %6, %7, %cst_7 {dimension_numbers = #tpu.dot_dimension_numbers<[1], [0], [0], [1], [0, 0, 1, 1], [], []>} : vector<8x48xf32>, vector<48x32xf32>, vector<8x32xf32> -> vector<8x32xf32>
    %10 = arith.addf %9, %8 : vector<8x32xf32>
    %cst_8 = arith.constant 0.000000e+00 : f32
    %11 = vector.broadcast %cst_8 : f32 to vector<8x32xf32>
    %12 = arith.cmpf ogt, %10, %11 : vector<8x32xf32>
    %cst_9 = arith.constant 0.00999999977 : f32
    %13 = vector.broadcast %cst_9 : f32 to vector<8x32xf32>
    %14 = arith.mulf %13, %10 : vector<8x32xf32>
    %15 = arith.select %12, %10, %14 : vector<8x32xi1>, vector<8x32xf32>
    %cst_10 = arith.constant dense<0.000000e+00> : vector<16x32xf32>
    %16 = tpu.matmul %0, %15, %cst_10 {dimension_numbers = #tpu.dot_dimension_numbers<[1], [0], [0], [1], [0, 0, 1, 1], [], []>} : vector<16x8xf32>, vector<8x32xf32>, vector<16x32xf32> -> vector<16x32xf32>
    %17 = vector.extract_strided_slice %16 {offsets = [0, 0], sizes = [8, 32], strides = [1, 1]} : vector<16x32xf32> to vector<8x32xf32>
    %18 = vector.extract_strided_slice %16 {offsets = [8, 0], sizes = [8, 32], strides = [1, 1]} : vector<16x32xf32> to vector<8x32xf32>
    %19 = tpu.concatenate %15, %17, %18 in 1 : vector<8x32xf32>, vector<8x32xf32>, vector<8x32xf32> -> vector<8x96xf32>
    %c48 = arith.constant 48 : index
    %c0_11 = arith.constant 0 : index
    %20 = vector.load %arg2[%c48, %c0_11] : memref<264x32xf32, #tpu.memory_space<vmem>>, vector<96x32xf32>
    %c248 = arith.constant 248 : index
    %c0_12 = arith.constant 0 : index
    %21 = vector.load %arg2[%c248, %c0_12] : memref<264x32xf32, #tpu.memory_space<vmem>>, vector<8x32xf32>
    %cst_13 = arith.constant dense<0.000000e+00> : vector<8x32xf32>
    %22 = tpu.matmul %19, %20, %cst_13 {dimension_numbers = #tpu.dot_dimension_numbers<[1], [0], [0], [1], [0, 0, 1, 1], [], []>} : vector<8x96xf32>, vector<96x32xf32>, vector<8x32xf32> -> vector<8x32xf32>
    %23 = arith.addf %22, %21 : vector<8x32xf32>
    %cst_14 = arith.constant 0.000000e+00 : f32
    %24 = vector.broadcast %cst_14 : f32 to vector<8x32xf32>
    %25 = arith.cmpf ogt, %23, %24 : vector<8x32xf32>
    %cst_15 = arith.constant 0.00999999977 : f32
    %26 = vector.broadcast %cst_15 : f32 to vector<8x32xf32>
    %27 = arith.mulf %26, %23 : vector<8x32xf32>
    %28 = arith.select %25, %23, %27 : vector<8x32xi1>, vector<8x32xf32>
    %cst_16 = arith.constant dense<0.000000e+00> : vector<16x32xf32>
    %29 = tpu.matmul %0, %28, %cst_16 {dimension_numbers = #tpu.dot_dimension_numbers<[1], [0], [0], [1], [0, 0, 1, 1], [], []>} : vector<16x8xf32>, vector<8x32xf32>, vector<16x32xf32> -> vector<16x32xf32>
    %30 = vector.extract_strided_slice %29 {offsets = [0, 0], sizes = [8, 32], strides = [1, 1]} : vector<16x32xf32> to vector<8x32xf32>
    %31 = vector.extract_strided_slice %29 {offsets = [8, 0], sizes = [8, 32], strides = [1, 1]} : vector<16x32xf32> to vector<8x32xf32>
    %32 = tpu.concatenate %28, %30, %31 in 1 : vector<8x32xf32>, vector<8x32xf32>, vector<8x32xf32> -> vector<8x96xf32>
    %c144 = arith.constant 144 : index
    %c0_17 = arith.constant 0 : index
    %33 = vector.load %arg2[%c144, %c0_17] : memref<264x32xf32, #tpu.memory_space<vmem>>, vector<96x32xf32>
    %c256 = arith.constant 256 : index
    %c0_18 = arith.constant 0 : index
    %34 = vector.load %arg2[%c256, %c0_18] : memref<264x32xf32, #tpu.memory_space<vmem>>, vector<8x32xf32>
    %cst_19 = arith.constant dense<0.000000e+00> : vector<8x32xf32>
    %35 = tpu.matmul %32, %33, %cst_19 {dimension_numbers = #tpu.dot_dimension_numbers<[1], [0], [0], [1], [0, 0, 1, 1], [], []>} : vector<8x96xf32>, vector<96x32xf32>, vector<8x32xf32> -> vector<8x32xf32>
    %36 = arith.addf %35, %34 : vector<8x32xf32>
    %cst_20 = arith.constant 0.000000e+00 : f32
    %37 = vector.broadcast %cst_20 : f32 to vector<8x32xf32>
    %38 = arith.cmpf ogt, %36, %37 : vector<8x32xf32>
    %cst_21 = arith.constant 0.00999999977 : f32
    %39 = vector.broadcast %cst_21 : f32 to vector<8x32xf32>
    %40 = arith.mulf %39, %36 : vector<8x32xf32>
    %41 = arith.select %38, %36, %40 : vector<8x32xi1>, vector<8x32xf32>
    %cst_22 = arith.constant dense<0.000000e+00> : vector<8x32xf32>
    %42 = tpu.matmul %1, %41, %cst_22 {dimension_numbers = #tpu.dot_dimension_numbers<[1], [0], [0], [1], [0, 0, 1, 1], [], []>} : vector<8x8xf32>, vector<8x32xf32>, vector<8x32xf32> -> vector<8x32xf32>
    %43 = vector.extract_strided_slice %42 {offsets = [0, 0], sizes = [4, 32], strides = [1, 1]} : vector<8x32xf32> to vector<4x32xf32>
    %44 = vector.extract_strided_slice %42 {offsets = [4, 0], sizes = [4, 32], strides = [1, 1]} : vector<8x32xf32> to vector<4x32xf32>
    %c0_23 = arith.constant 0 : index
    %c0_24 = arith.constant 0 : index
    %45 = vector.load %arg3[%c0_23, %c0_24] : memref<136x8xf32, #tpu.memory_space<vmem>>, vector<32x8xf32>
    %c32 = arith.constant 32 : index
    %c0_25 = arith.constant 0 : index
    %46 = vector.load %arg3[%c32, %c0_25] : memref<136x8xf32, #tpu.memory_space<vmem>>, vector<32x8xf32>
    %c96 = arith.constant 96 : index
    %c0_26 = arith.constant 0 : index
    %47 = vector.load %arg3[%c96, %c0_26] : memref<136x8xf32, #tpu.memory_space<vmem>>, vector<1x8xf32>
    %cst_27 = arith.constant dense<0.000000e+00> : vector<4x8xf32>
    %48 = tpu.matmul %43, %45, %cst_27 {dimension_numbers = #tpu.dot_dimension_numbers<[1], [0], [0], [1], [0, 0, 1, 1], [], []>} : vector<4x32xf32>, vector<32x8xf32>, vector<4x8xf32> -> vector<4x8xf32>
    %cst_28 = arith.constant dense<0.000000e+00> : vector<4x8xf32>
    %49 = tpu.matmul %44, %46, %cst_28 {dimension_numbers = #tpu.dot_dimension_numbers<[1], [0], [0], [1], [0, 0, 1, 1], [], []>} : vector<4x32xf32>, vector<32x8xf32>, vector<4x8xf32> -> vector<4x8xf32>
    %50 = arith.addf %48, %49 : vector<4x8xf32>
    %51 = vector.broadcast %47 : vector<1x8xf32> to vector<4x8xf32>
    %52 = arith.addf %50, %51 : vector<4x8xf32>
    %cst_29 = arith.constant 0.000000e+00 : f32
    %53 = vector.broadcast %cst_29 : f32 to vector<4x8xf32>
    %54 = arith.cmpf ogt, %52, %53 : vector<4x8xf32>
    %cst_30 = arith.constant 0.00999999977 : f32
    %55 = vector.broadcast %cst_30 : f32 to vector<4x8xf32>
    %56 = arith.mulf %55, %52 : vector<4x8xf32>
    %57 = arith.select %54, %52, %56 : vector<4x8xi1>, vector<4x8xf32>
    %c64 = arith.constant 64 : index
    %c0_31 = arith.constant 0 : index
    %58 = vector.load %arg3[%c64, %c0_31] : memref<136x8xf32, #tpu.memory_space<vmem>>, vector<8x8xf32>
    %c104 = arith.constant 104 : index
    %c0_32 = arith.constant 0 : index
    %59 = vector.load %arg3[%c104, %c0_32] : memref<136x8xf32, #tpu.memory_space<vmem>>, vector<1x8xf32>
    %cst_33 = arith.constant dense<0.000000e+00> : vector<4x8xf32>
    %60 = tpu.matmul %57, %58, %cst_33 {dimension_numbers = #tpu.dot_dimension_numbers<[1], [0], [0], [1], [0, 0, 1, 1], [], []>} : vector<4x8xf32>, vector<8x8xf32>, vector<4x8xf32> -> vector<4x8xf32>
    %61 = vector.broadcast %59 : vector<1x8xf32> to vector<4x8xf32>
    %62 = arith.addf %60, %61 : vector<4x8xf32>
    %cst_34 = arith.constant 0.000000e+00 : f32
    %63 = vector.broadcast %cst_34 : f32 to vector<4x8xf32>
    %64 = arith.cmpf ogt, %62, %63 : vector<4x8xf32>
    %cst_35 = arith.constant 0.00999999977 : f32
    %65 = vector.broadcast %cst_35 : f32 to vector<4x8xf32>
    %66 = arith.mulf %65, %62 : vector<4x8xf32>
    %67 = arith.select %64, %62, %66 : vector<4x8xi1>, vector<4x8xf32>
    %c72 = arith.constant 72 : index
    %c0_36 = arith.constant 0 : index
    %68 = vector.load %arg3[%c72, %c0_36] : memref<136x8xf32, #tpu.memory_space<vmem>>, vector<8x8xf32>
    %c112 = arith.constant 112 : index
    %c0_37 = arith.constant 0 : index
    %69 = vector.load %arg3[%c112, %c0_37] : memref<136x8xf32, #tpu.memory_space<vmem>>, vector<1x8xf32>
    %cst_38 = arith.constant dense<0.000000e+00> : vector<4x8xf32>
    %70 = tpu.matmul %67, %68, %cst_38 {dimension_numbers = #tpu.dot_dimension_numbers<[1], [0], [0], [1], [0, 0, 1, 1], [], []>} : vector<4x8xf32>, vector<8x8xf32>, vector<4x8xf32> -> vector<4x8xf32>
    %71 = vector.broadcast %69 : vector<1x8xf32> to vector<4x8xf32>
    %72 = arith.addf %70, %71 : vector<4x8xf32>
    %cst_39 = arith.constant 0.000000e+00 : f32
    %73 = vector.broadcast %cst_39 : f32 to vector<4x8xf32>
    %74 = arith.cmpf ogt, %72, %73 : vector<4x8xf32>
    %cst_40 = arith.constant 0.00999999977 : f32
    %75 = vector.broadcast %cst_40 : f32 to vector<4x8xf32>
    %76 = arith.mulf %75, %72 : vector<4x8xf32>
    %77 = arith.select %74, %72, %76 : vector<4x8xi1>, vector<4x8xf32>
    %c80 = arith.constant 80 : index
    %c0_41 = arith.constant 0 : index
    %78 = vector.load %arg3[%c80, %c0_41] : memref<136x8xf32, #tpu.memory_space<vmem>>, vector<8x8xf32>
    %c120 = arith.constant 120 : index
    %c0_42 = arith.constant 0 : index
    %79 = vector.load %arg3[%c120, %c0_42] : memref<136x8xf32, #tpu.memory_space<vmem>>, vector<1x8xf32>
    %cst_43 = arith.constant dense<0.000000e+00> : vector<4x8xf32>
    %80 = tpu.matmul %77, %78, %cst_43 {dimension_numbers = #tpu.dot_dimension_numbers<[1], [0], [0], [1], [0, 0, 1, 1], [], []>} : vector<4x8xf32>, vector<8x8xf32>, vector<4x8xf32> -> vector<4x8xf32>
    %81 = vector.broadcast %79 : vector<1x8xf32> to vector<4x8xf32>
    %82 = arith.addf %80, %81 : vector<4x8xf32>
    %cst_44 = arith.constant 0.000000e+00 : f32
    %83 = vector.broadcast %cst_44 : f32 to vector<4x8xf32>
    %84 = arith.cmpf ogt, %82, %83 : vector<4x8xf32>
    %cst_45 = arith.constant 0.00999999977 : f32
    %85 = vector.broadcast %cst_45 : f32 to vector<4x8xf32>
    %86 = arith.mulf %85, %82 : vector<4x8xf32>
    %87 = arith.select %84, %82, %86 : vector<4x8xi1>, vector<4x8xf32>
    %c88 = arith.constant 88 : index
    %c0_46 = arith.constant 0 : index
    %88 = vector.load %arg3[%c88, %c0_46] : memref<136x8xf32, #tpu.memory_space<vmem>>, vector<8x8xf32>
    %c128 = arith.constant 128 : index
    %c0_47 = arith.constant 0 : index
    %89 = vector.load %arg3[%c128, %c0_47] : memref<136x8xf32, #tpu.memory_space<vmem>>, vector<1x8xf32>
    %cst_48 = arith.constant dense<0.000000e+00> : vector<4x8xf32>
    %90 = tpu.matmul %87, %88, %cst_48 {dimension_numbers = #tpu.dot_dimension_numbers<[1], [0], [0], [1], [0, 0, 1, 1], [], []>} : vector<4x8xf32>, vector<8x8xf32>, vector<4x8xf32> -> vector<4x8xf32>
    %91 = vector.broadcast %89 : vector<1x8xf32> to vector<4x8xf32>
    %92 = arith.addf %90, %91 : vector<4x8xf32>
    %cst_49 = arith.constant 0.000000e+00 : f32
    %93 = vector.broadcast %cst_49 : f32 to vector<4x8xf32>
    %94 = arith.cmpf ogt, %92, %93 : vector<4x8xf32>
    %cst_50 = arith.constant 0.00999999977 : f32
    %95 = vector.broadcast %cst_50 : f32 to vector<4x8xf32>
    %96 = arith.mulf %95, %92 : vector<4x8xf32>
    %97 = arith.select %94, %92, %96 : vector<4x8xi1>, vector<4x8xf32>
    %cst_51 = arith.constant dense<0xFF800000> : vector<4xf32>
    %98 = vector.multi_reduction <maximumf>, %97, %cst_51 [1] : vector<4x8xf32> to vector<4xf32>
    %99 = vector.shape_cast %98 : vector<4xf32> to vector<4x1xf32>
    %100 = vector.broadcast %99 : vector<4x1xf32> to vector<4x8xf32>
    %101 = arith.subf %97, %100 : vector<4x8xf32>
    %102 = math.exp %101 : vector<4x8xf32>
    %cst_52 = arith.constant dense<0.000000e+00> : vector<4xf32>
    %103 = vector.multi_reduction <add>, %102, %cst_52 [1] : vector<4x8xf32> to vector<4xf32>
    %104 = vector.shape_cast %103 : vector<4xf32> to vector<4x1xf32>
    %105 = math.log %104 : vector<4x1xf32>
    %106 = vector.broadcast %105 : vector<4x1xf32> to vector<4x8xf32>
    %107 = arith.subf %101, %106 : vector<4x8xf32>
    %c0_53 = arith.constant 0 : index
    %c0_54 = arith.constant 0 : index
    %108 = vector.load %arg4[%c0_53, %c0_54] : memref<4x8xf32, #tpu.memory_space<vmem>>, vector<4x8xf32>
    tpu.vector_store %arg4[%c0_53, %c0_54], %107 {strides = array<i32>} : memref<4x8xf32, #tpu.memory_space<vmem>>, vector<4x8xf32>,
    return
  }
}

</mosaic_0001>

<llo_original>
// kernel: tpu_custom_call.1
$region0: #{tpu_custom_call.1}
  #allocation0 [shape = 'u32[]', space=smem, size = 0x4, offset = 0x4, fixed_abs, tag = 'smem constant byte address 0x4 - core index']
  #allocation1 [shape = 'u32[144,128]{1,0:T(1,128)}', space=vmem, size = 0x12000, scoped, tag = 'internal scratch']
  %s0 = inlined_call_operand.vmem [shape: f32[24,8], index: 0, kind: input, shape index: {}]
  %s1 = inlined_call_operand.vmem [shape: f32[8,16], index: 1, kind: input, shape index: {}]
  %s2 = inlined_call_operand.vmem [shape: f32[264,32], index: 2, kind: input, shape index: {}]
  %s3 = inlined_call_operand.vmem [shape: f32[136,8], index: 3, kind: input, shape index: {}]
  %s4 = inlined_call_operand.hbm [shape: f32[4,8], index: 4, kind: output, shape index: {}]
  %s5 = sld [smem:[#allocation0]]
  $region26: #{tpu_custom_call.1} parent=0
    _
  %s7 = ssub.s32 1, %s5
  %s8 = scalar_select 0, %s7, %s5
  $region1: #{tpu_custom_call.1} parent=0
    #allocation2 [shape = 'u8[2048]{0}', space=vmem, size = 0x800, scoped, tag = 'output window, operand 0, single buffered']
    #allocation3 [shape = 's32[1]{0}', space=sflag, size = 0x4, scoped, tag = 'scoped memory for tpu_custom_call.1']
    %9 = vsyncpa [#allocation3], 0
    // Predicated region
    $region2: #{tpu_custom_call.1} parent=1 // pred_check
      _
    $region3: #{tpu_custom_call.1} parent=1 // pred_check_branch
      %11 = sbr.rel (0) target = $region5
    $region4: #{tpu_custom_call.1} parent=1 // pred_region
      _
    $region5: #{tpu_custom_call.1} parent=1 // pred_fallthru
      _
    // Predicated region
    $region6: #{tpu_custom_call.1} parent=1 // pred_check
      _
    $region7: #{tpu_custom_call.1} parent=1 // pred_check_branch
      %13 = sbr.rel (0) target = $region9
    $region8: #{tpu_custom_call.1} parent=1 // pred_region
      _
    $region9: #{tpu_custom_call.1} parent=1 // pred_fallthru
      _
    // Predicated region
    $region10: #{tpu_custom_call.1} parent=1 // pred_check
      _
    $region11: #{tpu_custom_call.1} parent=1 // pred_check_branch
      %15 = sbr.rel (0) target = $region13
    $region12: #{tpu_custom_call.1} parent=1 // pred_region
      _
    $region13: #{tpu_custom_call.1} parent=1 // pred_fallthru
      _
    // Predicated region
    $region14: #{tpu_custom_call.1} parent=1 // pred_check
      _
    $region15: #{tpu_custom_call.1} parent=1 // pred_check_branch
      %17 = sbr.rel (0) target = $region17
    $region16: #{tpu_custom_call.1} parent=1 // pred_region
      _
    $region17: #{tpu_custom_call.1} parent=1 // pred_fallthru
      _
    %v18 = vld [vmem:[%s0] sm:$0xff]
    %v19 = vld [vmem:[%s0 + $0x8] sm:$0xff]
    %v20 = vld [vmem:[%s0 + $0x10] sm:$0xff]
    %v21 = vld [vmem:[%s1] sm:$0xff]
    %vm22 = vcmask 64512
    %v24 = vsel %vm22, %v18, 0
    %v27 = vsel %vm22, %v19, 0
    %29 = vmatprep.subr.mxu0 0.0
    %30 = vmatpush1.msra.mxu0 0.0
    %31 = vmatprep.subr.mxu0 0.0
    %32 = vmatpush1.msra.mxu0 0.0
    %33 = vmatprep.subr.mxu0 0.0
    %34 = vmatpush1.msra.mxu0 0.0
    %35 = vmatprep.subr.mxu0 0.0
    %36 = vmatpush1.msra.mxu0 0.0
    %37 = vmatprep.subr.mxu0 0.0
    %38 = vmatpush1.msra.mxu0 0.0
    %39 = vmatprep.subr.mxu0 0.0
    %40 = vmatpush1.msra.mxu0 0.0
    %41 = vmatprep.subr.mxu0 0.0
    %42 = vmatpush1.msra.mxu0 0.0
    %43 = vmatprep.subr.mxu0 0.0
    %44 = vmatpush1.msra.mxu0 0.0
    %45 = vmatprep.subr.mxu0 0.0
    %46 = vmatpush1.msra.mxu0 0.0
    %47 = vmatprep.subr.mxu0 0.0
    %48 = vmatpush1.msra.mxu0 0.0
    %49 = vmatprep.subr.mxu0 0.0
    %50 = vmatpush1.msra.mxu0 0.0
    %51 = vmatprep.subr.mxu0 0.0
    %52 = vmatpush1.msra.mxu0 0.0
    %53 = vmatprep.subr.mxu0 0.0
    %54 = vmatpush1.msra.mxu0 0.0
    %55 = vmatprep.subr.mxu0 0.0
    %56 = vmatpush1.msra.mxu0 0.0
    %57 = vmatprep.subr.mxu0 0.0
    %58 = vmatpush1.msra.mxu0 0.0
    %59 = vmatprep.subr.mxu0 0.0
    %60 = vmatpush1.msra.mxu0 %v21
    %61 = vmatprep.subr.mxu0 0.0
    %62 = vmatpush2.msra.mxu0 0.0
    %63 = vmatprep.subr.mxu0 0.0
    %64 = vmatpush2.msra.mxu0 0.0
    %65 = vmatprep.subr.mxu0 0.0
    %66 = vmatpush2.msra.mxu0 0.0
    %67 = vmatprep.subr.mxu0 0.0
    %68 = vmatpush2.msra.mxu0 0.0
    %69 = vmatprep.subr.mxu0 0.0
    %70 = vmatpush2.msra.mxu0 0.0
    %71 = vmatprep.subr.mxu0 0.0
    %72 = vmatpush2.msra.mxu0 0.0
    %73 = vmatprep.subr.mxu0 0.0
    %74 = vmatpush2.msra.mxu0 0.0
    %75 = vmatprep.subr.mxu0 0.0
    %76 = vmatpush2.msra.mxu0 0.0
    %77 = vmatprep.subr.mxu0 0.0
    %78 = vmatpush2.msra.mxu0 0.0
    %79 = vmatprep.subr.mxu0 0.0
    %80 = vmatpush2.msra.mxu0 0.0
    %81 = vmatprep.subr.mxu0 0.0
    %82 = vmatpush2.msra.mxu0 0.0
    %83 = vmatprep.subr.mxu0 0.0
    %84 = vmatpush2.msra.mxu0 0.0
    %85 = vmatprep.subr.mxu0 0.0
    %86 = vmatpush2.msra.mxu0 0.0
    %87 = vmatprep.subr.mxu0 0.0
    %88 = vmatpush2.msra.mxu0 0.0
    %89 = vmatprep.subr.mxu0 0.0
    %90 = vmatpush2.msra.mxu0 0.0
    %91 = vmatprep.subr.mxu0 0.0
    %92 = vmatpush2.msra.mxu0 0.0
    %93 = vmatprep.mubr.f32.mxu0 0.0
    %94 = vmatmul.mubr.f32.gmra.mxu0 %v24
    %v95 = vpop.f32.mrf.mxu0
    %v96 = vadd.f32 0.0, %v95
    %v97 = vpop.f32.mrf.mxu0
    %98 = vmatprep.mubr.f32.mxu0 0.0
    %99 = vmatmul.mubr.f32.gmra.mxu0 %v27
    %v100 = vpop.f32.mrf.mxu0
    %v101 = vadd.f32 0.0, %v100
    %v102 = vpop.f32.mrf.mxu0
    %103 = vdwg.mxu0
    %105 = vrot.lane.b32.xlu0 %v96, 16
    %v106 = vpop.permute.xlu0 %105
    %109 = vrot.lane.b32.xlu0 %v101, 32
    %v110 = vpop.permute.xlu0 %109
    %vm112 = vcmask 130048
    %v113 = vsel %vm112, %v21, %v106
    %vm114 = vcmask 261120
    %v115 = vsel %vm114, %v113, %v110
    %v116 = vld [vmem:[%s2] sm:$0xff]
    %v117 = vld [vmem:[%s2 + $0x8] sm:$0xff]
    %v118 = vld [vmem:[%s2 + $0x10] sm:$0xff]
    %v119 = vld [vmem:[%s2 + $0x18] sm:$0xff]
    %v120 = vld [vmem:[%s2 + $0x20] sm:$0xff]
    %v121 = vld [vmem:[%s2 + $0x28] sm:$0xff]
    %v122 = vld [vmem:[%s2 + $0xf0] sm:$0xff]
    %vm123 = vcmask 392192
    %v125 = vsel %vm123, %v115, 0
    %127 = vmatprep.subr.mxu0 0.0
    %128 = vmatpush1.msra.mxu0 0.0
    %129 = vmatprep.subr.mxu0 0.0
    %130 = vmatpush1.msra.mxu0 0.0
    %131 = vmatprep.subr.mxu0 0.0
    %132 = vmatpush1.msra.mxu0 0.0
    %133 = vmatprep.subr.mxu0 0.0
    %134 = vmatpush1.msra.mxu0 0.0
    %135 = vmatprep.subr.mxu0 0.0
    %136 = vmatpush1.msra.mxu0 0.0
    %137 = vmatprep.subr.mxu0 0.0
    %138 = vmatpush1.msra.mxu0 0.0
    %139 = vmatprep.subr.mxu0 0.0
    %140 = vmatpush1.msra.mxu0 0.0
    %141 = vmatprep.subr.mxu0 0.0
    %142 = vmatpush1.msra.mxu0 0.0
    %143 = vmatprep.subr.mxu0 0.0
    %144 = vmatpush1.msra.mxu0 0.0
    %145 = vmatprep.subr.mxu0 0.0
    %146 = vmatpush1.msra.mxu0 0.0
    %147 = vmatprep.subr.mxu0 0.0
    %148 = vmatpush1.msra.mxu0 %v121
    %149 = vmatprep.subr.mxu0 0.0
    %150 = vmatpush1.msra.mxu0 %v120
    %151 = vmatprep.subr.mxu0 0.0
    %152 = vmatpush1.msra.mxu0 %v119
    %153 = vmatprep.subr.mxu0 0.0
    %154 = vmatpush1.msra.mxu0 %v118
    %155 = vmatprep.subr.mxu0 0.0
    %156 = vmatpush1.msra.mxu0 %v117
    %157 = vmatprep.subr.mxu0 0.0
    %158 = vmatpush1.msra.mxu0 %v116
    %159 = vmatprep.subr.mxu0 0.0
    %160 = vmatpush2.msra.mxu0 0.0
    %161 = vmatprep.subr.mxu0 0.0
    %162 = vmatpush2.msra.mxu0 0.0
    %163 = vmatprep.subr.mxu0 0.0
    %164 = vmatpush2.msra.mxu0 0.0
    %165 = vmatprep.subr.mxu0 0.0
    %166 = vmatpush2.msra.mxu0 0.0
    %167 = vmatprep.subr.mxu0 0.0
    %168 = vmatpush2.msra.mxu0 0.0
    %169 = vmatprep.subr.mxu0 0.0
    %170 = vmatpush2.msra.mxu0 0.0
    %171 = vmatprep.subr.mxu0 0.0
    %172 = vmatpush2.msra.mxu0 0.0
    %173 = vmatprep.subr.mxu0 0.0
    %174 = vmatpush2.msra.mxu0 0.0
    %175 = vmatprep.subr.mxu0 0.0
    %176 = vmatpush2.msra.mxu0 0.0
    %177 = vmatprep.subr.mxu0 0.0
    %178 = vmatpush2.msra.mxu0 0.0
    %179 = vmatprep.subr.mxu0 0.0
    %180 = vmatpush2.msra.mxu0 0.0
    %181 = vmatprep.subr.mxu0 0.0
    %182 = vmatpush2.msra.mxu0 0.0
    %183 = vmatprep.subr.mxu0 0.0
    %184 = vmatpush2.msra.mxu0 0.0
    %185 = vmatprep.subr.mxu0 0.0
    %186 = vmatpush2.msra.mxu0 0.0
    %187 = vmatprep.subr.mxu0 0.0
    %188 = vmatpush2.msra.mxu0 0.0
    %189 = vmatprep.subr.mxu0 0.0
    %190 = vmatpush2.msra.mxu0 0.0
    %191 = vmatprep.mubr.f32.mxu0 0.0
    %192 = vmatmul.mubr.f32.gmra.mxu0 %v125
    %v193 = vpop.f32.mrf.mxu0
    %v194 = vadd.f32 %v122, %v193
    %v195 = vpop.f32.mrf.mxu0
    %196 = vdwg.mxu0
    %vm197 = vcmp.gt.f32.partialorder %v194, 0.0
    %v198 = vmul.f32 %v194, 0.01
    %v199 = vsel %vm197, %v194, %v198
    %200 = vmatprep.subr.mxu0 0.0
    %201 = vmatpush1.msra.mxu0 0.0
    %202 = vmatprep.subr.mxu0 0.0
    %203 = vmatpush1.msra.mxu0 0.0
    %204 = vmatprep.subr.mxu0 0.0
    %205 = vmatpush1.msra.mxu0 0.0
    %206 = vmatprep.subr.mxu0 0.0
    %207 = vmatpush1.msra.mxu0 0.0
    %208 = vmatprep.subr.mxu0 0.0
    %209 = vmatpush1.msra.mxu0 0.0
    %210 = vmatprep.subr.mxu0 0.0
    %211 = vmatpush1.msra.mxu0 0.0
    %212 = vmatprep.subr.mxu0 0.0
    %213 = vmatpush1.msra.mxu0 0.0
    %214 = vmatprep.subr.mxu0 0.0
    %215 = vmatpush1.msra.mxu0 0.0
    %216 = vmatprep.subr.mxu0 0.0
    %217 = vmatpush1.msra.mxu0 0.0
    %218 = vmatprep.subr.mxu0 0.0
    %219 = vmatpush1.msra.mxu0 0.0
    %220 = vmatprep.subr.mxu0 0.0
    %221 = vmatpush1.msra.mxu0 0.0
    %222 = vmatprep.subr.mxu0 0.0
    %223 = vmatpush1.msra.mxu0 0.0
    %224 = vmatprep.subr.mxu0 0.0
    %225 = vmatpush1.msra.mxu0 0.0
    %226 = vmatprep.subr.mxu0 0.0
    %227 = vmatpush1.msra.mxu0 0.0
    %228 = vmatprep.subr.mxu0 0.0
    %229 = vmatpush1.msra.mxu0 0.0
    %230 = vmatprep.subr.mxu0 0.0
    %231 = vmatpush1.msra.mxu0 %v199
    %232 = vmatprep.subr.mxu0 0.0
    %233 = vmatpush2.msra.mxu0 0.0
    %234 = vmatprep.subr.mxu0 0.0
    %235 = vmatpush2.msra.mxu0 0.0
    %236 = vmatprep.subr.mxu0 0.0
    %237 = vmatpush2.msra.mxu0 0.0
    %238 = vmatprep.subr.mxu0 0.0
    %239 = vmatpush2.msra.mxu0 0.0
    %240 = vmatprep.subr.mxu0 0.0
    %241 = vmatpush2.msra.mxu0 0.0
    %242 = vmatprep.subr.mxu0 0.0
    %243 = vmatpush2.msra.mxu0 0.0
    %244 = vmatprep.subr.mxu0 0.0
    %245 = vmatpush2.msra.mxu0 0.0
    %246 = vmatprep.subr.mxu0 0.0
    %247 = vmatpush2.msra.mxu0 0.0
    %248 = vmatprep.subr.mxu0 0.0
    %249 = vmatpush2.msra.mxu0 0.0
    %250 = vmatprep.subr.mxu0 0.0
    %251 = vmatpush2.msra.mxu0 0.0
    %252 = vmatprep.subr.mxu0 0.0
    %253 = vmatpush2.msra.mxu0 0.0
    %254 = vmatprep.subr.mxu0 0.0
    %255 = vmatpush2.msra.mxu0 0.0
    %256 = vmatprep.subr.mxu0 0.0
    %257 = vmatpush2.msra.mxu0 0.0
    %258 = vmatprep.subr.mxu0 0.0
    %259 = vmatpush2.msra.mxu0 0.0
    %260 = vmatprep.subr.mxu0 0.0
    %261 = vmatpush2.msra.mxu0 0.0
    %262 = vmatprep.subr.mxu0 0.0
    %263 = vmatpush2.msra.mxu0 0.0
    %264 = vmatprep.mubr.f32.mxu0 0.0
    %265 = vmatmul.mubr.f32.gmra.mxu0 %v24
    %v266 = vpop.f32.mrf.mxu0
    %v267 = vadd.f32 0.0, %v266
    %v268 = vpop.f32.mrf.mxu0
    %269 = vmatprep.mubr.f32.mxu0 0.0
    %270 = vmatmul.mubr.f32.gmra.mxu0 %v27
    %v271 = vpop.f32.mrf.mxu0
    %v272 = vadd.f32 0.0, %v271
    %v273 = vpop.f32.mrf.mxu0
    %274 = vdwg.mxu0
    %276 = vrot.lane.b32.xlu0 %v267, 32
    %v277 = vpop.permute.xlu0 %276
    %280 = vrot.lane.b32.xlu0 %v272, 64
    %v281 = vpop.permute.xlu0 %280
    %v283 = vsel %vm114, %v199, %v277
    %vm284 = vcmask 523264
    %v285 = vsel %vm284, %v283, %v281
    %v286 = vld [vmem:[%s2 + $0x30] sm:$0xff]
    %v287 = vld [vmem:[%s2 + $0x38] sm:$0xff]
    %v288 = vld [vmem:[%s2 + $0x40] sm:$0xff]
    %v289 = vld [vmem:[%s2 + $0x48] sm:$0xff]
    %v290 = vld [vmem:[%s2 + $0x50] sm:$0xff]
    %v291 = vld [vmem:[%s2 + $0x58] sm:$0xff]
    %v292 = vld [vmem:[%s2 + $0x60] sm:$0xff]
    %v293 = vld [vmem:[%s2 + $0x68] sm:$0xff]
    %v294 = vld [vmem:[%s2 + $0x70] sm:$0xff]
    %v295 = vld [vmem:[%s2 + $0x78] sm:$0xff]
    %v296 = vld [vmem:[%s2 + $0x80] sm:$0xff]
    %v297 = vld [vmem:[%s2 + $0x88] sm:$0xff]
    %v298 = vld [vmem:[%s2 + $0xf8] sm:$0xff]
    %vm299 = vcmask 785408
    %v301 = vsel %vm299, %v285, 0
    %303 = vmatprep.subr.mxu0 0.0
    %304 = vmatpush1.msra.mxu0 0.0
    %305 = vmatprep.subr.mxu0 0.0
    %306 = vmatpush1.msra.mxu0 0.0
    %307 = vmatprep.subr.mxu0 0.0
    %308 = vmatpush1.msra.mxu0 0.0
    %309 = vmatprep.subr.mxu0 0.0
    %310 = vmatpush1.msra.mxu0 0.0
    %311 = vmatprep.subr.mxu0 0.0
    %312 = vmatpush1.msra.mxu0 %v297
    %313 = vmatprep.subr.mxu0 0.0
    %314 = vmatpush1.msra.mxu0 %v296
    %315 = vmatprep.subr.mxu0 0.0
    %316 = vmatpush1.msra.mxu0 %v295
    %317 = vmatprep.subr.mxu0 0.0
    %318 = vmatpush1.msra.mxu0 %v294
    %319 = vmatprep.subr.mxu0 0.0
    %320 = vmatpush1.msra.mxu0 %v293
    %321 = vmatprep.subr.mxu0 0.0
    %322 = vmatpush1.msra.mxu0 %v292
    %323 = vmatprep.subr.mxu0 0.0
    %324 = vmatpush1.msra.mxu0 %v291
    %325 = vmatprep.subr.mxu0 0.0
    %326 = vmatpush1.msra.mxu0 %v290
    %327 = vmatprep.subr.mxu0 0.0
    %328 = vmatpush1.msra.mxu0 %v289
    %329 = vmatprep.subr.mxu0 0.0
    %330 = vmatpush1.msra.mxu0 %v288
    %331 = vmatprep.subr.mxu0 0.0
    %332 = vmatpush1.msra.mxu0 %v287
    %333 = vmatprep.subr.mxu0 0.0
    %334 = vmatpush1.msra.mxu0 %v286
    %335 = vmatprep.subr.mxu0 0.0
    %336 = vmatpush2.msra.mxu0 0.0
    %337 = vmatprep.subr.mxu0 0.0
    %338 = vmatpush2.msra.mxu0 0.0
    %339 = vmatprep.subr.mxu0 0.0
    %340 = vmatpush2.msra.mxu0 0.0
    %341 = vmatprep.subr.mxu0 0.0
    %342 = vmatpush2.msra.mxu0 0.0
    %343 = vmatprep.subr.mxu0 0.0
    %344 = vmatpush2.msra.mxu0 0.0
    %345 = vmatprep.subr.mxu0 0.0
    %346 = vmatpush2.msra.mxu0 0.0
    %347 = vmatprep.subr.mxu0 0.0
    %348 = vmatpush2.msra.mxu0 0.0
    %349 = vmatprep.subr.mxu0 0.0
    %350 = vmatpush2.msra.mxu0 0.0
    %351 = vmatprep.subr.mxu0 0.0
    %352 = vmatpush2.msra.mxu0 0.0
    %353 = vmatprep.subr.mxu0 0.0
    %354 = vmatpush2.msra.mxu0 0.0
    %355 = vmatprep.subr.mxu0 0.0
    %356 = vmatpush2.msra.mxu0 0.0
    %357 = vmatprep.subr.mxu0 0.0
    %358 = vmatpush2.msra.mxu0 0.0
    %359 = vmatprep.subr.mxu0 0.0
    %360 = vmatpush2.msra.mxu0 0.0
    %361 = vmatprep.subr.mxu0 0.0
    %362 = vmatpush2.msra.mxu0 0.0
    %363 = vmatprep.subr.mxu0 0.0
    %364 = vmatpush2.msra.mxu0 0.0
    %365 = vmatprep.subr.mxu0 0.0
    %366 = vmatpush2.msra.mxu0 0.0
    %367 = vmatprep.mubr.f32.mxu0 0.0
    %368 = vmatmul.mubr.f32.gmra.mxu0 %v301
    %v369 = vpop.f32.mrf.mxu0
    %v370 = vadd.f32 %v298, %v369
    %v371 = vpop.f32.mrf.mxu0
    %372 = vdwg.mxu0
    %vm373 = vcmp.gt.f32.partialorder %v370, 0.0
    %v374 = vmul.f32 %v370, 0.01
    %v375 = vsel %vm373, %v370, %v374
    %376 = vmatprep.subr.mxu0 0.0
    %377 = vmatpush1.msra.mxu0 0.0
    %378 = vmatprep.subr.mxu0 0.0
    %379 = vmatpush1.msra.mxu0 0.0
    %380 = vmatprep.subr.mxu0 0.0
    %381 = vmatpush1.msra.mxu0 0.0
    %382 = vmatprep.subr.mxu0 0.0
    %383 = vmatpush1.msra.mxu0 0.0
    %384 = vmatprep.subr.mxu0 0.0
    %385 = vmatpush1.msra.mxu0 0.0
    %386 = vmatprep.subr.mxu0 0.0
    %387 = vmatpush1.msra.mxu0 0.0
    %388 = vmatprep.subr.mxu0 0.0
    %389 = vmatpush1.msra.mxu0 0.0
    %390 = vmatprep.subr.mxu0 0.0
    %391 = vmatpush1.msra.mxu0 0.0
    %392 = vmatprep.subr.mxu0 0.0
    %393 = vmatpush1.msra.mxu0 0.0
    %394 = vmatprep.subr.mxu0 0.0
    %395 = vmatpush1.msra.mxu0 0.0
    %396 = vmatprep.subr.mxu0 0.0
    %397 = vmatpush1.msra.mxu0 0.0
    %398 = vmatprep.subr.mxu0 0.0
    %399 = vmatpush1.msra.mxu0 0.0
    %400 = vmatprep.subr.mxu0 0.0
    %401 = vmatpush1.msra.mxu0 0.0
    %402 = vmatprep.subr.mxu0 0.0
    %403 = vmatpush1.msra.mxu0 0.0
    %404 = vmatprep.subr.mxu0 0.0
    %405 = vmatpush1.msra.mxu0 0.0
    %406 = vmatprep.subr.mxu0 0.0
    %407 = vmatpush1.msra.mxu0 %v375
    %408 = vmatprep.subr.mxu0 0.0
    %409 = vmatpush2.msra.mxu0 0.0
    %410 = vmatprep.subr.mxu0 0.0
    %411 = vmatpush2.msra.mxu0 0.0
    %412 = vmatprep.subr.mxu0 0.0
    %413 = vmatpush2.msra.mxu0 0.0
    %414 = vmatprep.subr.mxu0 0.0
    %415 = vmatpush2.msra.mxu0 0.0
    %416 = vmatprep.subr.mxu0 0.0
    %417 = vmatpush2.msra.mxu0 0.0
    %418 = vmatprep.subr.mxu0 0.0
    %419 = vmatpush2.msra.mxu0 0.0
    %420 = vmatprep.subr.mxu0 0.0
    %421 = vmatpush2.msra.mxu0 0.0
    %422 = vmatprep.subr.mxu0 0.0
    %423 = vmatpush2.msra.mxu0 0.0
    %424 = vmatprep.subr.mxu0 0.0
    %425 = vmatpush2.msra.mxu0 0.0
    %426 = vmatprep.subr.mxu0 0.0
    %427 = vmatpush2.msra.mxu0 0.0
    %428 = vmatprep.subr.mxu0 0.0
    %429 = vmatpush2.msra.mxu0 0.0
    %430 = vmatprep.subr.mxu0 0.0
    %431 = vmatpush2.msra.mxu0 0.0
    %432 = vmatprep.subr.mxu0 0.0
    %433 = vmatpush2.msra.mxu0 0.0
    %434 = vmatprep.subr.mxu0 0.0
    %435 = vmatpush2.msra.mxu0 0.0
    %436 = vmatprep.subr.mxu0 0.0
    %437 = vmatpush2.msra.mxu0 0.0
    %438 = vmatprep.subr.mxu0 0.0
    %439 = vmatpush2.msra.mxu0 0.0
    %440 = vmatprep.mubr.f32.mxu0 0.0
    %441 = vmatmul.mubr.f32.gmra.mxu0 %v24
    %v442 = vpop.f32.mrf.mxu0
    %v443 = vadd.f32 0.0, %v442
    %v444 = vpop.f32.mrf.mxu0
    %445 = vmatprep.mubr.f32.mxu0 0.0
    %446 = vmatmul.mubr.f32.gmra.mxu0 %v27
    %v447 = vpop.f32.mrf.mxu0
    %v448 = vadd.f32 0.0, %v447
    %v449 = vpop.f32.mrf.mxu0
    %450 = vdwg.mxu0
    %452 = vrot.lane.b32.xlu0 %v443, 32
    %v453 = vpop.permute.xlu0 %452
    %456 = vrot.lane.b32.xlu0 %v448, 64
    %v457 = vpop.permute.xlu0 %456
    %v459 = vsel %vm114, %v375, %v453
    %v460 = vsel %vm284, %v459, %v457
    %v461 = vld [vmem:[%s2 + $0x90] sm:$0xff]
    %v462 = vld [vmem:[%s2 + $0x98] sm:$0xff]
    %v463 = vld [vmem:[%s2 + $0xa0] sm:$0xff]
    %v464 = vld [vmem:[%s2 + $0xa8] sm:$0xff]
    %v465 = vld [vmem:[%s2 + $0xb0] sm:$0xff]
    %v466 = vld [vmem:[%s2 + $0xb8] sm:$0xff]
    %v467 = vld [vmem:[%s2 + $0xc0] sm:$0xff]
    %v468 = vld [vmem:[%s2 + $0xc8] sm:$0xff]
    %v469 = vld [vmem:[%s2 + $0xd0] sm:$0xff]
    %v470 = vld [vmem:[%s2 + $0xd8] sm:$0xff]
    %v471 = vld [vmem:[%s2 + $0xe0] sm:$0xff]
    %v472 = vld [vmem:[%s2 + $0xe8] sm:$0xff]
    %v473 = vld [vmem:[%s2 + $0x100] sm:$0xff]
    %v475 = vsel %vm299, %v460, 0
    %477 = vmatprep.subr.mxu0 0.0
    %478 = vmatpush1.msra.mxu0 0.0
    %479 = vmatprep.subr.mxu0 0.0
    %480 = vmatpush1.msra.mxu0 0.0
    %481 = vmatprep.subr.mxu0 0.0
    %482 = vmatpush1.msra.mxu0 0.0
    %483 = vmatprep.subr.mxu0 0.0
    %484 = vmatpush1.msra.mxu0 0.0
    %485 = vmatprep.subr.mxu0 0.0
    %486 = vmatpush1.msra.mxu0 %v472
    %487 = vmatprep.subr.mxu0 0.0
    %488 = vmatpush1.msra.mxu0 %v471
    %489 = vmatprep.subr.mxu0 0.0
    %490 = vmatpush1.msra.mxu0 %v470
    %491 = vmatprep.subr.mxu0 0.0
    %492 = vmatpush1.msra.mxu0 %v469
    %493 = vmatprep.subr.mxu0 0.0
    %494 = vmatpush1.msra.mxu0 %v468
    %495 = vmatprep.subr.mxu0 0.0
    %496 = vmatpush1.msra.mxu0 %v467
    %497 = vmatprep.subr.mxu0 0.0
    %498 = vmatpush1.msra.mxu0 %v466
    %499 = vmatprep.subr.mxu0 0.0
    %500 = vmatpush1.msra.mxu0 %v465
    %501 = vmatprep.subr.mxu0 0.0
    %502 = vmatpush1.msra.mxu0 %v464
    %503 = vmatprep.subr.mxu0 0.0
    %504 = vmatpush1.msra.mxu0 %v463
    %505 = vmatprep.subr.mxu0 0.0
    %506 = vmatpush1.msra.mxu0 %v462
    %507 = vmatprep.subr.mxu0 0.0
    %508 = vmatpush1.msra.mxu0 %v461
    %509 = vmatprep.subr.mxu0 0.0
    %510 = vmatpush2.msra.mxu0 0.0
    %511 = vmatprep.subr.mxu0 0.0
    %512 = vmatpush2.msra.mxu0 0.0
    %513 = vmatprep.subr.mxu0 0.0
    %514 = vmatpush2.msra.mxu0 0.0
    %515 = vmatprep.subr.mxu0 0.0
    %516 = vmatpush2.msra.mxu0 0.0
    %517 = vmatprep.subr.mxu0 0.0
    %518 = vmatpush2.msra.mxu0 0.0
    %519 = vmatprep.subr.mxu0 0.0
    %520 = vmatpush2.msra.mxu0 0.0
    %521 = vmatprep.subr.mxu0 0.0
    %522 = vmatpush2.msra.mxu0 0.0
    %523 = vmatprep.subr.mxu0 0.0
    %524 = vmatpush2.msra.mxu0 0.0
    %525 = vmatprep.subr.mxu0 0.0
    %526 = vmatpush2.msra.mxu0 0.0
    %527 = vmatprep.subr.mxu0 0.0
    %528 = vmatpush2.msra.mxu0 0.0
    %529 = vmatprep.subr.mxu0 0.0
    %530 = vmatpush2.msra.mxu0 0.0
    %531 = vmatprep.subr.mxu0 0.0
    %532 = vmatpush2.msra.mxu0 0.0
    %533 = vmatprep.subr.mxu0 0.0
    %534 = vmatpush2.msra.mxu0 0.0
    %535 = vmatprep.subr.mxu0 0.0
    %536 = vmatpush2.msra.mxu0 0.0
    %537 = vmatprep.subr.mxu0 0.0
    %538 = vmatpush2.msra.mxu0 0.0
    %539 = vmatprep.subr.mxu0 0.0
    %540 = vmatpush2.msra.mxu0 0.0
    %541 = vmatprep.mubr.f32.mxu0 0.0
    %542 = vmatmul.mubr.f32.gmra.mxu0 %v475
    %v543 = vpop.f32.mrf.mxu0
    %v544 = vadd.f32 %v473, %v543
    %v545 = vpop.f32.mrf.mxu0
    %546 = vdwg.mxu0
    %vm547 = vcmp.gt.f32.partialorder %v544, 0.0
    %v548 = vmul.f32 %v544, 0.01
    %v549 = vsel %vm547, %v544, %v548
    %v551 = vsel %vm22, %v20, 0
    %553 = vmatprep.subr.mxu0 0.0
    %554 = vmatpush1.msra.mxu0 0.0
    %555 = vmatprep.subr.mxu0 0.0
    %556 = vmatpush1.msra.mxu0 0.0
    %557 = vmatprep.subr.mxu0 0.0
    %558 = vmatpush1.msra.mxu0 0.0
    %559 = vmatprep.subr.mxu0 0.0
    %560 = vmatpush1.msra.mxu0 0.0
    %561 = vmatprep.subr.mxu0 0.0
    %562 = vmatpush1.msra.mxu0 0.0
    %563 = vmatprep.subr.mxu0 0.0
    %564 = vmatpush1.msra.mxu0 0.0
    %565 = vmatprep.subr.mxu0 0.0
    %566 = vmatpush1.msra.mxu0 0.0
    %567 = vmatprep.subr.mxu0 0.0
    %568 = vmatpush1.msra.mxu0 0.0
    %569 = vmatprep.subr.mxu0 0.0
    %570 = vmatpush1.msra.mxu0 0.0
    %571 = vmatprep.subr.mxu0 0.0
    %572 = vmatpush1.msra.mxu0 0.0
    %573 = vmatprep.subr.mxu0 0.0
    %574 = vmatpush1.msra.mxu0 0.0
    %575 = vmatprep.subr.mxu0 0.0
    %576 = vmatpush1.msra.mxu0 0.0
    %577 = vmatprep.subr.mxu0 0.0
    %578 = vmatpush1.msra.mxu0 0.0
    %579 = vmatprep.subr.mxu0 0.0
    %580 = vmatpush1.msra.mxu0 0.0
    %581 = vmatprep.subr.mxu0 0.0
    %582 = vmatpush1.msra.mxu0 0.0
    %583 = vmatprep.subr.mxu0 0.0
    %584 = vmatpush1.msra.mxu0 %v549
    %585 = vmatprep.subr.mxu0 0.0
    %586 = vmatpush2.msra.mxu0 0.0
    %587 = vmatprep.subr.mxu0 0.0
    %588 = vmatpush2.msra.mxu0 0.0
    %589 = vmatprep.subr.mxu0 0.0
    %590 = vmatpush2.msra.mxu0 0.0
    %591 = vmatprep.subr.mxu0 0.0
    %592 = vmatpush2.msra.mxu0 0.0
    %593 = vmatprep.subr.mxu0 0.0
    %594 = vmatpush2.msra.mxu0 0.0
    %595 = vmatprep.subr.mxu0 0.0
    %596 = vmatpush2.msra.mxu0 0.0
    %597 = vmatprep.subr.mxu0 0.0
    %598 = vmatpush2.msra.mxu0 0.0
    %599 = vmatprep.subr.mxu0 0.0
    %600 = vmatpush2.msra.mxu0 0.0
    %601 = vmatprep.subr.mxu0 0.0
    %602 = vmatpush2.msra.mxu0 0.0
    %603 = vmatprep.subr.mxu0 0.0
    %604 = vmatpush2.msra.mxu0 0.0
    %605 = vmatprep.subr.mxu0 0.0
    %606 = vmatpush2.msra.mxu0 0.0
    %607 = vmatprep.subr.mxu0 0.0
    %608 = vmatpush2.msra.mxu0 0.0
    %609 = vmatprep.subr.mxu0 0.0
    %610 = vmatpush2.msra.mxu0 0.0
    %611 = vmatprep.subr.mxu0 0.0
    %612 = vmatpush2.msra.mxu0 0.0
    %613 = vmatprep.subr.mxu0 0.0
    %614 = vmatpush2.msra.mxu0 0.0
    %615 = vmatprep.subr.mxu0 0.0
    %616 = vmatpush2.msra.mxu0 0.0
    %617 = vmatprep.mubr.f32.mxu0 0.0
    %618 = vmatmul.mubr.f32.gmra.mxu0 %v551
    %v619 = vpop.f32.mrf.mxu0
    %v620 = vadd.f32 0.0, %v619
    %v621 = vpop.f32.mrf.mxu0
    %622 = vdwg.mxu0
    %v623 = vld [vmem:[%s3] sm:$0xff]
    %v624 = vld [vmem:[%s3 + $0x8] sm:$0xff]
    %v625 = vld [vmem:[%s3 + $0x10] sm:$0xff]
    %v626 = vld [vmem:[%s3 + $0x18] sm:$0xff]
    %v627 = vld [vmem:[%s3 + $0x20] sm:$0xff]
    %v628 = vld [vmem:[%s3 + $0x28] sm:$0xff]
    %v629 = vld [vmem:[%s3 + $0x30] sm:$0xff]
    %v630 = vld [vmem:[%s3 + $0x38] sm:$0xff]
    %v631 = vld [vmem:[%s3 + $0x60] sm:$0x1]
    %v633 = vrot.slane %v620, 4
    %v634 = vsel %vm114, %v633, 0
    %636 = vmatprep.subr.mxu0 0.0
    %637 = vmatpush1.msra.mxu0 0.0
    %638 = vmatprep.subr.mxu0 0.0
    %639 = vmatpush1.msra.mxu0 0.0
    %640 = vmatprep.subr.mxu0 0.0
    %641 = vmatpush1.msra.mxu0 0.0
    %642 = vmatprep.subr.mxu0 0.0
    %643 = vmatpush1.msra.mxu0 0.0
    %644 = vmatprep.subr.mxu0 0.0
    %645 = vmatpush1.msra.mxu0 0.0
    %646 = vmatprep.subr.mxu0 0.0
    %647 = vmatpush1.msra.mxu0 0.0
    %648 = vmatprep.subr.mxu0 0.0
    %649 = vmatpush1.msra.mxu0 0.0
    %650 = vmatprep.subr.mxu0 0.0
    %651 = vmatpush1.msra.mxu0 0.0
    %652 = vmatprep.subr.mxu0 0.0
    %653 = vmatpush1.msra.mxu0 0.0
    %654 = vmatprep.subr.mxu0 0.0
    %655 = vmatpush1.msra.mxu0 0.0
    %656 = vmatprep.subr.mxu0 0.0
    %657 = vmatpush1.msra.mxu0 0.0
    %658 = vmatprep.subr.mxu0 0.0
    %659 = vmatpush1.msra.mxu0 0.0
    %660 = vmatprep.subr.mxu0 0.0
    %661 = vmatpush1.msra.mxu0 %v630
    %662 = vmatprep.subr.mxu0 0.0
    %663 = vmatpush1.msra.mxu0 %v629
    %664 = vmatprep.subr.mxu0 0.0
    %665 = vmatpush1.msra.mxu0 %v628
    %666 = vmatprep.subr.mxu0 0.0
    %667 = vmatpush1.msra.mxu0 %v627
    %668 = vmatprep.subr.mxu0 0.0
    %669 = vmatpush2.msra.mxu0 0.0
    %670 = vmatprep.subr.mxu0 0.0
    %671 = vmatpush2.msra.mxu0 0.0
    %672 = vmatprep.subr.mxu0 0.0
    %673 = vmatpush2.msra.mxu0 0.0
    %674 = vmatprep.subr.mxu0 0.0
    %675 = vmatpush2.msra.mxu0 0.0
    %676 = vmatprep.subr.mxu0 0.0
    %677 = vmatpush2.msra.mxu0 0.0
    %678 = vmatprep.subr.mxu0 0.0
    %679 = vmatpush2.msra.mxu0 0.0
    %680 = vmatprep.subr.mxu0 0.0
    %681 = vmatpush2.msra.mxu0 0.0
    %682 = vmatprep.subr.mxu0 0.0
    %683 = vmatpush2.msra.mxu0 0.0
    %684 = vmatprep.subr.mxu0 0.0
    %685 = vmatpush2.msra.mxu0 0.0
    %686 = vmatprep.subr.mxu0 0.0
    %687 = vmatpush2.msra.mxu0 0.0
    %688 = vmatprep.subr.mxu0 0.0
    %689 = vmatpush2.msra.mxu0 0.0
    %690 = vmatprep.subr.mxu0 0.0
    %691 = vmatpush2.msra.mxu0 0.0
    %692 = vmatprep.subr.mxu0 0.0
    %693 = vmatpush2.msra.mxu0 0.0
    %694 = vmatprep.subr.mxu0 0.0
    %695 = vmatpush2.msra.mxu0 0.0
    %696 = vmatprep.subr.mxu0 0.0
    %697 = vmatpush2.msra.mxu0 0.0
    %698 = vmatprep.subr.mxu0 0.0
    %699 = vmatpush2.msra.mxu0 0.0
    %700 = vmatprep.mubr.f32.mxu0 0.0
    %701 = vmatmul.mubr.f32.gmra.mxu0 %v634
    %v702 = vpop.f32.mrf.mxu0
    %v703 = vadd.f32 0.0, %v702
    %v704 = vpop.f32.mrf.mxu0
    %705 = vdwg.mxu0
    %v706 = vsel %vm114, %v620, 0
    %708 = vmatprep.subr.mxu0 0.0
    %709 = vmatpush1.msra.mxu0 0.0
    %710 = vmatprep.subr.mxu0 0.0
    %711 = vmatpush1.msra.mxu0 0.0
    %712 = vmatprep.subr.mxu0 0.0
    %713 = vmatpush1.msra.mxu0 0.0
    %714 = vmatprep.subr.mxu0 0.0
    %715 = vmatpush1.msra.mxu0 0.0
    %716 = vmatprep.subr.mxu0 0.0
    %717 = vmatpush1.msra.mxu0 0.0
    %718 = vmatprep.subr.mxu0 0.0
    %719 = vmatpush1.msra.mxu0 0.0
    %720 = vmatprep.subr.mxu0 0.0
    %721 = vmatpush1.msra.mxu0 0.0
    %722 = vmatprep.subr.mxu0 0.0
    %723 = vmatpush1.msra.mxu0 0.0
    %724 = vmatprep.subr.mxu0 0.0
    %725 = vmatpush1.msra.mxu0 0.0
    %726 = vmatprep.subr.mxu0 0.0
    %727 = vmatpush1.msra.mxu0 0.0
    %728 = vmatprep.subr.mxu0 0.0
    %729 = vmatpush1.msra.mxu0 0.0
    %730 = vmatprep.subr.mxu0 0.0
    %731 = vmatpush1.msra.mxu0 0.0
    %732 = vmatprep.subr.mxu0 0.0
    %733 = vmatpush1.msra.mxu0 %v626
    %734 = vmatprep.subr.mxu0 0.0
    %735 = vmatpush1.msra.mxu0 %v625
    %736 = vmatprep.subr.mxu0 0.0
    %737 = vmatpush1.msra.mxu0 %v624
    %738 = vmatprep.subr.mxu0 0.0
    %739 = vmatpush1.msra.mxu0 %v623
    %740 = vmatprep.subr.mxu0 0.0
    %741 = vmatpush2.msra.mxu0 0.0
    %742 = vmatprep.subr.mxu0 0.0
    %743 = vmatpush2.msra.mxu0 0.0
    %744 = vmatprep.subr.mxu0 0.0
    %745 = vmatpush2.msra.mxu0 0.0
    %746 = vmatprep.subr.mxu0 0.0
    %747 = vmatpush2.msra.mxu0 0.0
    %748 = vmatprep.subr.mxu0 0.0
    %749 = vmatpush2.msra.mxu0 0.0
    %750 = vmatprep.subr.mxu0 0.0
    %751 = vmatpush2.msra.mxu0 0.0
    %752 = vmatprep.subr.mxu0 0.0
    %753 = vmatpush2.msra.mxu0 0.0
    %754 = vmatprep.subr.mxu0 0.0
    %755 = vmatpush2.msra.mxu0 0.0
    %756 = vmatprep.subr.mxu0 0.0
    %757 = vmatpush2.msra.mxu0 0.0
    %758 = vmatprep.subr.mxu0 0.0
    %759 = vmatpush2.msra.mxu0 0.0
    %760 = vmatprep.subr.mxu0 0.0
    %761 = vmatpush2.msra.mxu0 0.0
    %762 = vmatprep.subr.mxu0 0.0
    %763 = vmatpush2.msra.mxu0 0.0
    %764 = vmatprep.subr.mxu0 0.0
    %765 = vmatpush2.msra.mxu0 0.0
    %766 = vmatprep.subr.mxu0 0.0
    %767 = vmatpush2.msra.mxu0 0.0
    %768 = vmatprep.subr.mxu0 0.0
    %769 = vmatpush2.msra.mxu0 0.0
    %770 = vmatprep.subr.mxu0 0.0
    %771 = vmatpush2.msra.mxu0 0.0
    %772 = vmatprep.mubr.f32.mxu0 0.0
    %773 = vmatmul.mubr.f32.gmra.mxu0 %v706
    %v774 = vpop.f32.mrf.mxu0
    %v775 = vadd.f32 %v703, %v774
    %v776 = vpop.f32.mrf.mxu0
    %777 = vdwg.mxu0
    %v778 = vlaneseq
    %v779 = vshrl.u32 %v778, 7
    %v780 = vsub.s32 0, %v779
    %v781 = vrot.slane %v631, %v780
    %v782 = vadd.f32 %v775, %v781
    %vm783 = vcmp.gt.f32.partialorder %v782, 0.0
    %v784 = vmul.f32 %v782, 0.01
    %v785 = vsel %vm783, %v782, %v784
    %v786 = vld [vmem:[%s3 + $0x40] sm:$0xff]
    %v787 = vld [vmem:[%s3 + $0x68] sm:$0x1]
    %v788 = vlaneseq
    %v789 = vshrl.u32 %v788, 7
    %v790 = vsub.s32 0, %v789
    %v791 = vrot.slane %v787, %v790
    %v793 = vsel %vm22, %v785, 0
    %795 = vmatprep.subr.mxu0 0.0
    %796 = vmatpush1.msra.mxu0 0.0
    %797 = vmatprep.subr.mxu0 0.0
    %798 = vmatpush1.msra.mxu0 0.0
    %799 = vmatprep.subr.mxu0 0.0
    %800 = vmatpush1.msra.mxu0 0.0
    %801 = vmatprep.subr.mxu0 0.0
    %802 = vmatpush1.msra.mxu0 0.0
    %803 = vmatprep.subr.mxu0 0.0
    %804 = vmatpush1.msra.mxu0 0.0
    %805 = vmatprep.subr.mxu0 0.0
    %806 = vmatpush1.msra.mxu0 0.0
    %807 = vmatprep.subr.mxu0 0.0
    %808 = vmatpush1.msra.mxu0 0.0
    %809 = vmatprep.subr.mxu0 0.0
    %810 = vmatpush1.msra.mxu0 0.0
    %811 = vmatprep.subr.mxu0 0.0
    %812 = vmatpush1.msra.mxu0 0.0
    %813 = vmatprep.subr.mxu0 0.0
    %814 = vmatpush1.msra.mxu0 0.0
    %815 = vmatprep.subr.mxu0 0.0
    %816 = vmatpush1.msra.mxu0 0.0
    %817 = vmatprep.subr.mxu0 0.0
    %818 = vmatpush1.msra.mxu0 0.0
    %819 = vmatprep.subr.mxu0 0.0
    %820 = vmatpush1.msra.mxu0 0.0
    %821 = vmatprep.subr.mxu0 0.0
    %822 = vmatpush1.msra.mxu0 0.0
    %823 = vmatprep.subr.mxu0 0.0
    %824 = vmatpush1.msra.mxu0 0.0
    %825 = vmatprep.subr.mxu0 0.0
    %826 = vmatpush1.msra.mxu0 %v786
    %827 = vmatprep.subr.mxu0 0.0
    %828 = vmatpush2.msra.mxu0 0.0
    %829 = vmatprep.subr.mxu0 0.0
    %830 = vmatpush2.msra.mxu0 0.0
    %831 = vmatprep.subr.mxu0 0.0
    %832 = vmatpush2.msra.mxu0 0.0
    %833 = vmatprep.subr.mxu0 0.0
    %834 = vmatpush2.msra.mxu0 0.0
    %835 = vmatprep.subr.mxu0 0.0
    %836 = vmatpush2.msra.mxu0 0.0
    %837 = vmatprep.subr.mxu0 0.0
    %838 = vmatpush2.msra.mxu0 0.0
    %839 = vmatprep.subr.mxu0 0.0
    %840 = vmatpush2.msra.mxu0 0.0
    %841 = vmatprep.subr.mxu0 0.0
    %842 = vmatpush2.msra.mxu0 0.0
    %843 = vmatprep.subr.mxu0 0.0
    %844 = vmatpush2.msra.mxu0 0.0
    %845 = vmatprep.subr.mxu0 0.0
    %846 = vmatpush2.msra.mxu0 0.0
    %847 = vmatprep.subr.mxu0 0.0
    %848 = vmatpush2.msra.mxu0 0.0
    %849 = vmatprep.subr.mxu0 0.0
    %850 = vmatpush2.msra.mxu0 0.0
    %851 = vmatprep.subr.mxu0 0.0
    %852 = vmatpush2.msra.mxu0 0.0
    %853 = vmatprep.subr.mxu0 0.0
    %854 = vmatpush2.msra.mxu0 0.0
    %855 = vmatprep.subr.mxu0 0.0
    %856 = vmatpush2.msra.mxu0 0.0
    %857 = vmatprep.subr.mxu0 0.0
    %858 = vmatpush2.msra.mxu0 0.0
    %859 = vmatprep.mubr.f32.mxu0 0.0
    %860 = vmatmul.mubr.f32.gmra.mxu0 %v793
    %v861 = vpop.f32.mrf.mxu0
    %v862 = vadd.f32 %v791, %v861
    %v863 = vpop.f32.mrf.mxu0
    %864 = vdwg.mxu0
    %vm865 = vcmp.gt.f32.partialorder %v862, 0.0
    %v866 = vmul.f32 %v862, 0.01
    %v867 = vsel %vm865, %v862, %v866
    %v868 = vld [vmem:[%s3 + $0x48] sm:$0xff]
    %v869 = vld [vmem:[%s3 + $0x70] sm:$0x1]
    %v870 = vlaneseq
    %v871 = vshrl.u32 %v870, 7
    %v872 = vsub.s32 0, %v871
    %v873 = vrot.slane %v869, %v872
    %v875 = vsel %vm22, %v867, 0
    %877 = vmatprep.subr.mxu0 0.0
    %878 = vmatpush1.msra.mxu0 0.0
    %879 = vmatprep.subr.mxu0 0.0
    %880 = vmatpush1.msra.mxu0 0.0
    %881 = vmatprep.subr.mxu0 0.0
    %882 = vmatpush1.msra.mxu0 0.0
    %883 = vmatprep.subr.mxu0 0.0
    %884 = vmatpush1.msra.mxu0 0.0
    %885 = vmatprep.subr.mxu0 0.0
    %886 = vmatpush1.msra.mxu0 0.0
    %887 = vmatprep.subr.mxu0 0.0
    %888 = vmatpush1.msra.mxu0 0.0
    %889 = vmatprep.subr.mxu0 0.0
    %890 = vmatpush1.msra.mxu0 0.0
    %891 = vmatprep.subr.mxu0 0.0
    %892 = vmatpush1.msra.mxu0 0.0
    %893 = vmatprep.subr.mxu0 0.0
    %894 = vmatpush1.msra.mxu0 0.0
    %895 = vmatprep.subr.mxu0 0.0
    %896 = vmatpush1.msra.mxu0 0.0
    %897 = vmatprep.subr.mxu0 0.0
    %898 = vmatpush1.msra.mxu0 0.0
    %899 = vmatprep.subr.mxu0 0.0
    %900 = vmatpush1.msra.mxu0 0.0
    %901 = vmatprep.subr.mxu0 0.0
    %902 = vmatpush1.msra.mxu0 0.0
    %903 = vmatprep.subr.mxu0 0.0
    %904 = vmatpush1.msra.mxu0 0.0
    %905 = vmatprep.subr.mxu0 0.0
    %906 = vmatpush1.msra.mxu0 0.0
    %907 = vmatprep.subr.mxu0 0.0
    %908 = vmatpush1.msra.mxu0 %v868
    %909 = vmatprep.subr.mxu0 0.0
    %910 = vmatpush2.msra.mxu0 0.0
    %911 = vmatprep.subr.mxu0 0.0
    %912 = vmatpush2.msra.mxu0 0.0
    %913 = vmatprep.subr.mxu0 0.0
    %914 = vmatpush2.msra.mxu0 0.0
    %915 = vmatprep.subr.mxu0 0.0
    %916 = vmatpush2.msra.mxu0 0.0
    %917 = vmatprep.subr.mxu0 0.0
    %918 = vmatpush2.msra.mxu0 0.0
    %919 = vmatprep.subr.mxu0 0.0
    %920 = vmatpush2.msra.mxu0 0.0
    %921 = vmatprep.subr.mxu0 0.0
    %922 = vmatpush2.msra.mxu0 0.0
    %923 = vmatprep.subr.mxu0 0.0
    %924 = vmatpush2.msra.mxu0 0.0
    %925 = vmatprep.subr.mxu0 0.0
    %926 = vmatpush2.msra.mxu0 0.0
    %927 = vmatprep.subr.mxu0 0.0
    %928 = vmatpush2.msra.mxu0 0.0
    %929 = vmatprep.subr.mxu0 0.0
    %930 = vmatpush2.msra.mxu0 0.0
    %931 = vmatprep.subr.mxu0 0.0
    %932 = vmatpush2.msra.mxu0 0.0
    %933 = vmatprep.subr.mxu0 0.0
    %934 = vmatpush2.msra.mxu0 0.0
    %935 = vmatprep.subr.mxu0 0.0
    %936 = vmatpush2.msra.mxu0 0.0
    %937 = vmatprep.subr.mxu0 0.0
    %938 = vmatpush2.msra.mxu0 0.0
    %939 = vmatprep.subr.mxu0 0.0
    %940 = vmatpush2.msra.mxu0 0.0
    %941 = vmatprep.mubr.f32.mxu0 0.0
    %942 = vmatmul.mubr.f32.gmra.mxu0 %v875
    %v943 = vpop.f32.mrf.mxu0
    %v944 = vadd.f32 %v873, %v943
    %v945 = vpop.f32.mrf.mxu0
    %946 = vdwg.mxu0
    %vm947 = vcmp.gt.f32.partialorder %v944, 0.0
    %v948 = vmul.f32 %v944, 0.01
    %v949 = vsel %vm947, %v944, %v948
    %v950 = vld [vmem:[%s3 + $0x50] sm:$0xff]
    %v951 = vld [vmem:[%s3 + $0x78] sm:$0x1]
    %v952 = vlaneseq
    %v953 = vshrl.u32 %v952, 7
    %v954 = vsub.s32 0, %v953
    %v955 = vrot.slane %v951, %v954
    %v957 = vsel %vm22, %v949, 0
    %959 = vmatprep.subr.mxu0 0.0
    %960 = vmatpush1.msra.mxu0 0.0
    %961 = vmatprep.subr.mxu0 0.0
    %962 = vmatpush1.msra.mxu0 0.0
    %963 = vmatprep.subr.mxu0 0.0
    %964 = vmatpush1.msra.mxu0 0.0
    %965 = vmatprep.subr.mxu0 0.0
    %966 = vmatpush1.msra.mxu0 0.0
    %967 = vmatprep.subr.mxu0 0.0
    %968 = vmatpush1.msra.mxu0 0.0
    %969 = vmatprep.subr.mxu0 0.0
    %970 = vmatpush1.msra.mxu0 0.0
    %971 = vmatprep.subr.mxu0 0.0
    %972 = vmatpush1.msra.mxu0 0.0
    %973 = vmatprep.subr.mxu0 0.0
    %974 = vmatpush1.msra.mxu0 0.0
    %975 = vmatprep.subr.mxu0 0.0
    %976 = vmatpush1.msra.mxu0 0.0
    %977 = vmatprep.subr.mxu0 0.0
    %978 = vmatpush1.msra.mxu0 0.0
    %979 = vmatprep.subr.mxu0 0.0
    %980 = vmatpush1.msra.mxu0 0.0
    %981 = vmatprep.subr.mxu0 0.0
    %982 = vmatpush1.msra.mxu0 0.0
    %983 = vmatprep.subr.mxu0 0.0
    %984 = vmatpush1.msra.mxu0 0.0
    %985 = vmatprep.subr.mxu0 0.0
    %986 = vmatpush1.msra.mxu0 0.0
    %987 = vmatprep.subr.mxu0 0.0
    %988 = vmatpush1.msra.mxu0 0.0
    %989 = vmatprep.subr.mxu0 0.0
    %990 = vmatpush1.msra.mxu0 %v950
    %991 = vmatprep.subr.mxu0 0.0
    %992 = vmatpush2.msra.mxu0 0.0
    %993 = vmatprep.subr.mxu0 0.0
    %994 = vmatpush2.msra.mxu0 0.0
    %995 = vmatprep.subr.mxu0 0.0
    %996 = vmatpush2.msra.mxu0 0.0
    %997 = vmatprep.subr.mxu0 0.0
    %998 = vmatpush2.msra.mxu0 0.0
    %999 = vmatprep.subr.mxu0 0.0
    %1000 = vmatpush2.msra.mxu0 0.0
    %1001 = vmatprep.subr.mxu0 0.0
    %1002 = vmatpush2.msra.mxu0 0.0
    %1003 = vmatprep.subr.mxu0 0.0
    %1004 = vmatpush2.msra.mxu0 0.0
    %1005 = vmatprep.subr.mxu0 0.0
    %1006 = vmatpush2.msra.mxu0 0.0
    %1007 = vmatprep.subr.mxu0 0.0
    %1008 = vmatpush2.msra.mxu0 0.0
    %1009 = vmatprep.subr.mxu0 0.0
    %1010 = vmatpush2.msra.mxu0 0.0
    %1011 = vmatprep.subr.mxu0 0.0
    %1012 = vmatpush2.msra.mxu0 0.0
    %1013 = vmatprep.subr.mxu0 0.0
    %1014 = vmatpush2.msra.mxu0 0.0
    %1015 = vmatprep.subr.mxu0 0.0
    %1016 = vmatpush2.msra.mxu0 0.0
    %1017 = vmatprep.subr.mxu0 0.0
    %1018 = vmatpush2.msra.mxu0 0.0
    %1019 = vmatprep.subr.mxu0 0.0
    %1020 = vmatpush2.msra.mxu0 0.0
    %1021 = vmatprep.subr.mxu0 0.0
    %1022 = vmatpush2.msra.mxu0 0.0
    %1023 = vmatprep.mubr.f32.mxu0 0.0
    %1024 = vmatmul.mubr.f32.gmra.mxu0 %v957
    %v1025 = vpop.f32.mrf.mxu0
    %v1026 = vadd.f32 %v955, %v1025
    %v1027 = vpop.f32.mrf.mxu0
    %1028 = vdwg.mxu0
    %vm1029 = vcmp.gt.f32.partialorder %v1026, 0.0
    %v1030 = vmul.f32 %v1026, 0.01
    %v1031 = vsel %vm1029, %v1026, %v1030
    %v1032 = vld [vmem:[%s3 + $0x58] sm:$0xff]
    %v1033 = vld [vmem:[%s3 + $0x80] sm:$0x1]
    %v1034 = vlaneseq
    %v1035 = vshrl.u32 %v1034, 7
    %v1036 = vsub.s32 0, %v1035
    %v1037 = vrot.slane %v1033, %v1036
    %v1039 = vsel %vm22, %v1031, 0
    %1041 = vmatprep.subr.mxu0 0.0
    %1042 = vmatpush1.msra.mxu0 0.0
    %1043 = vmatprep.subr.mxu0 0.0
    %1044 = vmatpush1.msra.mxu0 0.0
    %1045 = vmatprep.subr.mxu0 0.0
    %1046 = vmatpush1.msra.mxu0 0.0
    %1047 = vmatprep.subr.mxu0 0.0
    %1048 = vmatpush1.msra.mxu0 0.0
    %1049 = vmatprep.subr.mxu0 0.0
    %1050 = vmatpush1.msra.mxu0 0.0
    %1051 = vmatprep.subr.mxu0 0.0
    %1052 = vmatpush1.msra.mxu0 0.0
    %1053 = vmatprep.subr.mxu0 0.0
    %1054 = vmatpush1.msra.mxu0 0.0
    %1055 = vmatprep.subr.mxu0 0.0
    %1056 = vmatpush1.msra.mxu0 0.0
    %1057 = vmatprep.subr.mxu0 0.0
    %1058 = vmatpush1.msra.mxu0 0.0
    %1059 = vmatprep.subr.mxu0 0.0
    %1060 = vmatpush1.msra.mxu0 0.0
    %1061 = vmatprep.subr.mxu0 0.0
    %1062 = vmatpush1.msra.mxu0 0.0
    %1063 = vmatprep.subr.mxu0 0.0
    %1064 = vmatpush1.msra.mxu0 0.0
    %1065 = vmatprep.subr.mxu0 0.0
    %1066 = vmatpush1.msra.mxu0 0.0
    %1067 = vmatprep.subr.mxu0 0.0
    %1068 = vmatpush1.msra.mxu0 0.0
    %1069 = vmatprep.subr.mxu0 0.0
    %1070 = vmatpush1.msra.mxu0 0.0
    %1071 = vmatprep.subr.mxu0 0.0
    %1072 = vmatpush1.msra.mxu0 %v1032
    %1073 = vmatprep.subr.mxu0 0.0
    %1074 = vmatpush2.msra.mxu0 0.0
    %1075 = vmatprep.subr.mxu0 0.0
    %1076 = vmatpush2.msra.mxu0 0.0
    %1077 = vmatprep.subr.mxu0 0.0
    %1078 = vmatpush2.msra.mxu0 0.0
    %1079 = vmatprep.subr.mxu0 0.0
    %1080 = vmatpush2.msra.mxu0 0.0
    %1081 = vmatprep.subr.mxu0 0.0
    %1082 = vmatpush2.msra.mxu0 0.0
    %1083 = vmatprep.subr.mxu0 0.0
    %1084 = vmatpush2.msra.mxu0 0.0
    %1085 = vmatprep.subr.mxu0 0.0
    %1086 = vmatpush2.msra.mxu0 0.0
    %1087 = vmatprep.subr.mxu0 0.0
    %1088 = vmatpush2.msra.mxu0 0.0
    %1089 = vmatprep.subr.mxu0 0.0
    %1090 = vmatpush2.msra.mxu0 0.0
    %1091 = vmatprep.subr.mxu0 0.0
    %1092 = vmatpush2.msra.mxu0 0.0
    %1093 = vmatprep.subr.mxu0 0.0
    %1094 = vmatpush2.msra.mxu0 0.0
    %1095 = vmatprep.subr.mxu0 0.0
    %1096 = vmatpush2.msra.mxu0 0.0
    %1097 = vmatprep.subr.mxu0 0.0
    %1098 = vmatpush2.msra.mxu0 0.0
    %1099 = vmatprep.subr.mxu0 0.0
    %1100 = vmatpush2.msra.mxu0 0.0
    %1101 = vmatprep.subr.mxu0 0.0
    %1102 = vmatpush2.msra.mxu0 0.0
    %1103 = vmatprep.subr.mxu0 0.0
    %1104 = vmatpush2.msra.mxu0 0.0
    %1105 = vmatprep.mubr.f32.mxu0 0.0
    %1106 = vmatmul.mubr.f32.gmra.mxu0 %v1039
    %v1107 = vpop.f32.mrf.mxu0
    %v1108 = vadd.f32 %v1037, %v1107
    %v1109 = vpop.f32.mrf.mxu0
    %1110 = vdwg.mxu0
    %vm1111 = vcmp.gt.f32.partialorder %v1108, 0.0
    %v1112 = vmul.f32 %v1108, 0.01
    %v1113 = vsel %vm1111, %v1108, %v1112
    %vm1114 = vcmask 60416
    %v1115 = vsel %vm1114, %v1113, -inf
    %1116 = vmax.xlane.f32.xlu0 %v1115
    %v1117 = vpop.xlane.xlu0 %1116
    %v1118 = vsub.f32 %v1113, %v1117
    %v1119 = vmul.f32 %v1118, 1.442695
    %v1120 = vpow.pop %v1119
    %v1121 = vsel %vm1114, %v1120, 0.0
    %1122 = vadd.xlane.f32.xlu0 %v1121
    %v1123 = vpop.xlane.xlu0 %1122
    %v1124 = vlog2.pop %v1123
    %v1125 = vmul.f32 %v1124, 0.6931472
    %v1126 = vsub.f32 %v1118, %v1125
    %1127 = vst.msk [vmem:[#allocation2] sm:$0xf] %vm1114, %v1126
    // Predicated region
    $region18: #{tpu_custom_call.1} parent=1 // pred_check
      _
    $region19: #{tpu_custom_call.1} parent=1 // pred_check_branch
      %1129 = sbr.rel (0) target = $region21
    $region20: #{tpu_custom_call.1} parent=1 // pred_region
      %s1131 = ssub.s32 64, 64
      %1132 = vsyncadd [#allocation3], %s1131
      %s1134 = sshll.u32 [#allocation2], 4
      %s1135 = int_to_ptr.vmem [resolvable:$true] %s1134
      %1137 = dma.vmem_to_hbm [thread:$0]  %s1135, 64, %s4, [#allocation3]
    $region21: #{tpu_custom_call.1} parent=1 // pred_fallthru
      _
    // Predicated region
    $region22: #{tpu_custom_call.1} parent=1 // pred_check
      _
    $region23: #{tpu_custom_call.1} parent=1 // pred_check_branch
      %1139 = sbr.rel (0) target = $region25
    $region24: #{tpu_custom_call.1} parent=1 // pred_region
      %1140 = dma.done [#allocation3], 64
    $region25: #{tpu_custom_call.1} parent=1 // pred_fallthru
      _
    %1141 = vsyncpa [#allocation3], 1

</llo_original>
